<compile_context>
chip_gen: v7x
topology: tpu7x:2x2x1
jax: 0.10.0
libtpu: 0.0.40
codegen_flags: <defaults>
</compile_context>

<pallas_src>
import functools
import math

import jax
import jax.numpy as jnp
from jax.experimental import pallas as pl
from jax.experimental.pallas import tpu as pltpu

INPUTVECTORSIZE = 300
BINARYVECTORSIZE = 128


def _round_up(n, m):
    return ((n + m - 1) // m) * m


def autoencoder_kernel(x_ref, w1_ref, b1_ref, w2_ref, b2_ref, o_ref, *,
                       encoder_dtype, decoder_dtype):
    # ---- encoder: h = x @ W1 + b1 (f32 accumulation on the MXU) -----------
    x = x_ref[...]
    w1 = w1_ref[...]
    if encoder_dtype != jnp.float32:
        # Narrow MXU operands only; accumulation / bias / compare stay f32.
        x = x.astype(encoder_dtype)
        w1 = w1.astype(encoder_dtype)
    h = jnp.dot(x, w1, preferred_element_type=jnp.float32) + b1_ref[...]

    # ---- straight-through estimator forward: (h > 0).float() --------------
    # Cast directly to the decoder MXU dtype: 0.0 / 1.0 are exact in bf16.
    z = (h > 0).astype(decoder_dtype)

    # ---- decoder: tanh(z @ W2 + b2) ---------------------------------------
    w2 = w2_ref[...]
    if decoder_dtype != jnp.float32:
        w2 = w2.astype(decoder_dtype)
    y = jnp.dot(z, w2, preferred_element_type=jnp.float32) + b2_ref[...]
    o_ref[...] = jnp.tanh(y)


def autoencoder_forward(x, w1, b1, w2, b2, *, batch_tile=1024,
                        precision="mixed"):
    """precision: 'f32' (exact), 'mixed' (f32 encoder / bf16 decoder operands,
    matches f32 reference to ~1e-3), 'bf16' (both matmuls bf16 operands)."""
    B, D_in = x.shape
    assert D_in == INPUTVECTORSIZE
    assert w1.shape == (INPUTVECTORSIZE, BINARYVECTORSIZE)
    assert b1.shape == (1, BINARYVECTORSIZE)
    assert w2.shape == (BINARYVECTORSIZE, INPUTVECTORSIZE)
    assert b2.shape == (1, INPUTVECTORSIZE)

    enc_dt, dec_dt = {
        "f32": (jnp.float32, jnp.float32),
        "mixed": (jnp.float32, jnp.bfloat16),
        "bf16": (jnp.bfloat16, jnp.bfloat16),
    }[precision]

    # --- pick batch tile ----------------------------------------------------
    # Multiple of 8 sublanes; clipped to ceil(B/2) so (a) tiny batches don't
    # blow up into a huge tile and (b) there are always >= 2 grid steps once
    # B > 8, so v7x's two TensorCores both get work on the "parallel" axis.
    bt = max(8, min(_round_up(batch_tile, 8), _round_up(pl.cdiv(B, 2), 8)))
    grid = (pl.cdiv(B, bt),)   # last block may over-hang B; rows independent,
                               # over-hang output rows are masked on write.

    # VMEM at bt=1024: x/out blocks ~1.2 MB each (x2 double-buffer) + ~0.35 MB
    # resident weights -> ~5 MB, far under the 32 MiB scoped default on every
    # generation (incl. v7x's 64 MiB physical).  No vmem_limit_bytes needed.
    kernel = functools.partial(autoencoder_kernel,
                               encoder_dtype=enc_dt, decoder_dtype=dec_dt)

    return pl.pallas_call(
        kernel,
        out_shape=jax.ShapeDtypeStruct((B, INPUTVECTORSIZE), jnp.float32),
        grid_spec=pltpu.PrefetchScalarGridSpec(
            num_scalar_prefetch=0,
            grid=grid,
            in_specs=[
                # x: tile over batch only, full 300-wide feature dim
                # (== full array dim, so the (8,128) rule is satisfied).
                # (pipeline_mode=pl.Buffered(3) is a possible few-% sweep here
                #  and on out_specs once sitting at the HBM roofline.)
                pl.BlockSpec((bt, INPUTVECTORSIZE), lambda i: (i, 0)),
                # weights / biases: constant block index -> fetched once,
                # VMEM-resident across all grid steps.
                pl.BlockSpec((INPUTVECTORSIZE, BINARYVECTORSIZE),
                             lambda i: (0, 0)),
                pl.BlockSpec((1, BINARYVECTORSIZE), lambda i: (0, 0)),
                pl.BlockSpec((BINARYVECTORSIZE, INPUTVECTORSIZE),
                             lambda i: (0, 0)),
                pl.BlockSpec((1, INPUTVECTORSIZE), lambda i: (0, 0)),
            ],
            out_specs=pl.BlockSpec((bt, INPUTVECTORSIZE), lambda i: (i, 0)),
        ),
        compiler_params=pltpu.CompilerParams(
            dimension_semantics=("parallel",),
        ),
    )(x, w1, b1, w2, b2)


def init_params(key):
    """Deterministic init mimicking torch.nn.Linear defaults
    (uniform in [-1/sqrt(fan_in), 1/sqrt(fan_in)])."""
    k1, k2, k3, k4 = jax.random.split(key, 4)
    bound1 = 1.0 / math.sqrt(INPUTVECTORSIZE)
    bound2 = 1.0 / math.sqrt(BINARYVECTORSIZE)
    # stored pre-transposed for the (x @ W) convention
    w1 = jax.random.uniform(k1, (INPUTVECTORSIZE, BINARYVECTORSIZE),
                            jnp.float32, -bound1, bound1)
    b1 = jax.random.uniform(k2, (1, BINARYVECTORSIZE),
                            jnp.float32, -bound1, bound1)
    w2 = jax.random.uniform(k3, (BINARYVECTORSIZE, INPUTVECTORSIZE),
                            jnp.float32, -bound2, bound2)
    b2 = jax.random.uniform(k4, (1, INPUTVECTORSIZE),
                            jnp.float32, -bound2, bound2)
    return w1, b1, w2, b2


def reference_forward(x, w1, b1, w2, b2):
    h = x @ w1 + b1
    z = (h > 0).astype(jnp.float32)
    return jnp.tanh(z @ w2 + b2)


if __name__ == "__main__":
    key = jax.random.PRNGKey(0)
    k_params, k_x1, k_x2 = jax.random.split(key, 3)
    w1, b1, w2, b2 = init_params(k_params)

    # Case 1: small batch, f32 path -> exact match with the f32 reference.
    B1 = 8
    x1 = jax.random.normal(k_x1, (B1, INPUTVECTORSIZE), jnp.float32)
    out1 = jax.block_until_ready(
        autoencoder_forward(x1, w1, b1, w2, b2, precision="f32"))
    ref1 = reference_forward(x1, w1, b1, w2, b2)
    assert out1.shape == (B1, INPUTVECTORSIZE)
    assert jnp.allclose(out1, ref1, atol=1e-5, rtol=1e-5), "mismatch (f32, B=8)"

    # Case 2: ragged batch (not a tile multiple, over-hanging last block),
    # default mixed precision (bf16 decoder-matmul operands, ~1e-3 rel).
    B2 = 300
    x2 = jax.random.normal(k_x2, (B2, INPUTVECTORSIZE), jnp.float32)
    out2 = jax.block_until_ready(
        autoencoder_forward(x2, w1, b1, w2, b2, batch_tile=128))
    ref2 = reference_forward(x2, w1, b1, w2, b2)
    assert out2.shape == (B2, INPUTVECTORSIZE)
    assert jnp.allclose(out2, ref2, atol=2e-2, rtol=2e-2), "mismatch (mixed, B=300)"

    print("KERNEL_OK")
</pallas_src>

<mosaic_0001>
module attributes {stable_mosaic.version = 11 : i64} {
  func.func @autoencoder_kernel(%arg0: i32, %arg1: memref<8x300xf32, #tpu.memory_space<vmem>>, %arg2: memref<300x128xf32, #tpu.memory_space<vmem>>, %arg3: memref<1x128xf32, #tpu.memory_space<vmem>>, %arg4: memref<128x300xf32, #tpu.memory_space<vmem>>, %arg5: memref<1x300xf32, #tpu.memory_space<vmem>>, %arg6: memref<8x300xf32, #tpu.memory_space<vmem>>) attributes {dimension_semantics = [#tpu.dimension_semantics<parallel>], iteration_bounds = array<i64: 1>, scalar_prefetch = 0 : i64, scratch_operands = 0 : i64, tpu.core_type = #tpu.core_type<tc>, window_params = [{transform_indices = @transform_0, window_bounds = array<i64: 8, 300>}, {pipeline_mode = #tpu.pipeline_mode<synchronous>, transform_indices = @transform_1, window_bounds = array<i64: 300, 128>}, {pipeline_mode = #tpu.pipeline_mode<synchronous>, transform_indices = @transform_2, window_bounds = array<i64: 1, 128>}, {pipeline_mode = #tpu.pipeline_mode<synchronous>, transform_indices = @transform_3, window_bounds = array<i64: 128, 300>}, {pipeline_mode = #tpu.pipeline_mode<synchronous>, transform_indices = @transform_4, window_bounds = array<i64: 1, 300>}, {transform_indices = @transform_5, window_bounds = array<i64: 8, 300>}]} {
    %c0 = arith.constant 0 : index
    %c0_0 = arith.constant 0 : index
    %0 = vector.load %arg1[%c0, %c0_0] : memref<8x300xf32, #tpu.memory_space<vmem>>, vector<8x300xf32>
    %c0_1 = arith.constant 0 : index
    %c0_2 = arith.constant 0 : index
    %1 = vector.load %arg2[%c0_1, %c0_2] : memref<300x128xf32, #tpu.memory_space<vmem>>, vector<300x128xf32>
    %cst = arith.constant dense<0.000000e+00> : vector<8x128xf32>
    %2 = tpu.matmul %0, %1, %cst {dimension_numbers = #tpu.dot_dimension_numbers<[1], [0], [0], [1], [0, 0, 1, 1], [], []>} : vector<8x300xf32>, vector<300x128xf32>, vector<8x128xf32> -> vector<8x128xf32>
    %c0_3 = arith.constant 0 : index
    %c0_4 = arith.constant 0 : index
    %3 = vector.load %arg3[%c0_3, %c0_4] : memref<1x128xf32, #tpu.memory_space<vmem>>, vector<1x128xf32>
    %4 = vector.broadcast %3 : vector<1x128xf32> to vector<8x128xf32>
    %5 = arith.addf %2, %4 : vector<8x128xf32>
    %cst_5 = arith.constant 0.000000e+00 : f32
    %6 = vector.broadcast %cst_5 : f32 to vector<8x128xf32>
    %7 = arith.cmpf ogt, %5, %6 : vector<8x128xf32>
    %8 = arith.extui %7 : vector<8x128xi1> to vector<8x128xi32>
    %9 = arith.sitofp %8 : vector<8x128xi32> to vector<8x128xf32>
    %c0_6 = arith.constant 0 : index
    %c0_7 = arith.constant 0 : index
    %10 = vector.load %arg4[%c0_6, %c0_7] : memref<128x300xf32, #tpu.memory_space<vmem>>, vector<128x300xf32>
    %cst_8 = arith.constant dense<0.000000e+00> : vector<8x300xf32>
    %11 = tpu.matmul %9, %10, %cst_8 {dimension_numbers = #tpu.dot_dimension_numbers<[1], [0], [0], [1], [0, 0, 1, 1], [], []>} : vector<8x128xf32>, vector<128x300xf32>, vector<8x300xf32> -> vector<8x300xf32>
    %c0_9 = arith.constant 0 : index
    %c0_10 = arith.constant 0 : index
    %12 = vector.load %arg5[%c0_9, %c0_10] : memref<1x300xf32, #tpu.memory_space<vmem>>, vector<1x300xf32>
    %13 = vector.broadcast %12 : vector<1x300xf32> to vector<8x300xf32>
    %14 = arith.addf %11, %13 : vector<8x300xf32>
    %15 = math.tanh %14 : vector<8x300xf32>
    %c0_11 = arith.constant 0 : index
    %c0_12 = arith.constant 0 : index
    %16 = vector.load %arg6[%c0_11, %c0_12] : memref<8x300xf32, #tpu.memory_space<vmem>>, vector<8x300xf32>
    tpu.vector_store %arg6[%c0_11, %c0_12], %15 {strides = array<i32>} : memref<8x300xf32, #tpu.memory_space<vmem>>, vector<8x300xf32>,
    return
  }
  func.func @transform_0(%arg0: i32) -> (i32, i32) {
    %c0_i32 = arith.constant 0 : i32
    %c0_i32_0 = arith.constant 0 : i32
    return %arg0, %c0_i32 : i32, i32
  }
  func.func @transform_1(%arg0: i32) -> (i32, i32) {
    %c0_i32 = arith.constant 0 : i32
    %c0_i32_0 = arith.constant 0 : i32
    %c0_i32_1 = arith.constant 0 : i32
    return %c0_i32, %c0_i32_0 : i32, i32
  }
  func.func @transform_2(%arg0: i32) -> (i32, i32) {
    %c0_i32 = arith.constant 0 : i32
    %c0_i32_0 = arith.constant 0 : i32
    %c0_i32_1 = arith.constant 0 : i32
    return %c0_i32, %c0_i32_0 : i32, i32
  }
  func.func @transform_3(%arg0: i32) -> (i32, i32) {
    %c0_i32 = arith.constant 0 : i32
    %c0_i32_0 = arith.constant 0 : i32
    %c0_i32_1 = arith.constant 0 : i32
    return %c0_i32, %c0_i32_0 : i32, i32
  }
  func.func @transform_4(%arg0: i32) -> (i32, i32) {
    %c0_i32 = arith.constant 0 : i32
    %c0_i32_0 = arith.constant 0 : i32
    %c0_i32_1 = arith.constant 0 : i32
    return %c0_i32, %c0_i32_0 : i32, i32
  }
  func.func @transform_5(%arg0: i32) -> (i32, i32) {
    %c0_i32 = arith.constant 0 : i32
    %c0_i32_0 = arith.constant 0 : i32
    return %arg0, %c0_i32 : i32, i32
  }
}

</mosaic_0001>

<llo_original>
// kernel: tpu_custom_call.1
$region0: #{tpu_custom_call.1}
  #allocation0 [shape = 'u32[]', space=smem, size = 0x4, offset = 0x4, fixed_abs, tag = 'smem constant byte address 0x4 - core index']
  #allocation1 [shape = 'u32[144,128]{1,0:T(1,128)}', space=vmem, size = 0x12000, scoped, tag = 'internal scratch']
  %s0 = inlined_call_operand.vmem [shape: f32[8,300], index: 0, kind: input, shape index: {}]
  %s1 = inlined_call_operand.vmem [shape: f32[300,128], index: 1, kind: input, shape index: {}]
  %s2 = inlined_call_operand.vmem [shape: f32[1,128], index: 2, kind: input, shape index: {}]
  %s3 = inlined_call_operand.vmem [shape: f32[128,300], index: 3, kind: input, shape index: {}]
  %s4 = inlined_call_operand.vmem [shape: f32[1,300], index: 4, kind: input, shape index: {}]
  %s5 = inlined_call_operand.hbm [shape: f32[8,300], index: 5, kind: output, shape index: {}]
  %s6 = sld [smem:[#allocation0]]
  $region30: #{tpu_custom_call.1} parent=0
    _
  %s8 = ssub.s32 1, %s6
  %s9 = scalar_select 0, %s8, %s6
  $region1: #{tpu_custom_call.1} parent=0
    #allocation2 [shape = 'u8[12288]{0}', space=vmem, size = 0x3000, scoped, tag = 'output window, operand 0, single buffered']
    #allocation3 [shape = 's32[1]{0}', space=sflag, size = 0x4, scoped, tag = 'scoped memory for tpu_custom_call.1']
    %10 = vsyncpa [#allocation3], 0
    // Predicated region
    $region2: #{tpu_custom_call.1} parent=1 // pred_check
      _
    $region3: #{tpu_custom_call.1} parent=1 // pred_check_branch
      %12 = sbr.rel (0) target = $region5
    $region4: #{tpu_custom_call.1} parent=1 // pred_region
      _
    $region5: #{tpu_custom_call.1} parent=1 // pred_fallthru
      _
    // Predicated region
    $region6: #{tpu_custom_call.1} parent=1 // pred_check
      _
    $region7: #{tpu_custom_call.1} parent=1 // pred_check_branch
      %14 = sbr.rel (0) target = $region9
    $region8: #{tpu_custom_call.1} parent=1 // pred_region
      _
    $region9: #{tpu_custom_call.1} parent=1 // pred_fallthru
      _
    // Predicated region
    $region10: #{tpu_custom_call.1} parent=1 // pred_check
      _
    $region11: #{tpu_custom_call.1} parent=1 // pred_check_branch
      %16 = sbr.rel (0) target = $region13
    $region12: #{tpu_custom_call.1} parent=1 // pred_region
      _
    $region13: #{tpu_custom_call.1} parent=1 // pred_fallthru
      _
    // Predicated region
    $region14: #{tpu_custom_call.1} parent=1 // pred_check
      _
    $region15: #{tpu_custom_call.1} parent=1 // pred_check_branch
      %18 = sbr.rel (0) target = $region17
    $region16: #{tpu_custom_call.1} parent=1 // pred_region
      _
    $region17: #{tpu_custom_call.1} parent=1 // pred_fallthru
      _
    // Predicated region
    $region18: #{tpu_custom_call.1} parent=1 // pred_check
      _
    $region19: #{tpu_custom_call.1} parent=1 // pred_check_branch
      %20 = sbr.rel (0) target = $region21
    $region20: #{tpu_custom_call.1} parent=1 // pred_region
      _
    $region21: #{tpu_custom_call.1} parent=1 // pred_fallthru
      _
    %v21 = vld [vmem:[%s0] sm:$0xff]
    %v22 = vld [vmem:[%s0 + $0x8] sm:$0xff]
    %v23 = vld [vmem:[%s0 + $0x10] sm:$0xff]
    %v24 = vld [vmem:[%s1] sm:$0xff]
    %v25 = vld [vmem:[%s1 + $0x8] sm:$0xff]
    %v26 = vld [vmem:[%s1 + $0x10] sm:$0xff]
    %v27 = vld [vmem:[%s1 + $0x18] sm:$0xff]
    %v28 = vld [vmem:[%s1 + $0x20] sm:$0xff]
    %v29 = vld [vmem:[%s1 + $0x28] sm:$0xff]
    %v30 = vld [vmem:[%s1 + $0x30] sm:$0xff]
    %v31 = vld [vmem:[%s1 + $0x38] sm:$0xff]
    %v32 = vld [vmem:[%s1 + $0x40] sm:$0xff]
    %v33 = vld [vmem:[%s1 + $0x48] sm:$0xff]
    %v34 = vld [vmem:[%s1 + $0x50] sm:$0xff]
    %v35 = vld [vmem:[%s1 + $0x58] sm:$0xff]
    %v36 = vld [vmem:[%s1 + $0x60] sm:$0xff]
    %v37 = vld [vmem:[%s1 + $0x68] sm:$0xff]
    %v38 = vld [vmem:[%s1 + $0x70] sm:$0xff]
    %v39 = vld [vmem:[%s1 + $0x78] sm:$0xff]
    %v40 = vld [vmem:[%s1 + $0x80] sm:$0xff]
    %v41 = vld [vmem:[%s1 + $0x88] sm:$0xff]
    %v42 = vld [vmem:[%s1 + $0x90] sm:$0xff]
    %v43 = vld [vmem:[%s1 + $0x98] sm:$0xff]
    %v44 = vld [vmem:[%s1 + $0xa0] sm:$0xff]
    %v45 = vld [vmem:[%s1 + $0xa8] sm:$0xff]
    %v46 = vld [vmem:[%s1 + $0xb0] sm:$0xff]
    %v47 = vld [vmem:[%s1 + $0xb8] sm:$0xff]
    %v48 = vld [vmem:[%s1 + $0xc0] sm:$0xff]
    %v49 = vld [vmem:[%s1 + $0xc8] sm:$0xff]
    %v50 = vld [vmem:[%s1 + $0xd0] sm:$0xff]
    %v51 = vld [vmem:[%s1 + $0xd8] sm:$0xff]
    %v52 = vld [vmem:[%s1 + $0xe0] sm:$0xff]
    %v53 = vld [vmem:[%s1 + $0xe8] sm:$0xff]
    %v54 = vld [vmem:[%s1 + $0xf0] sm:$0xff]
    %v55 = vld [vmem:[%s1 + $0xf8] sm:$0xff]
    %v56 = vld [vmem:[%s1 + $0x100] sm:$0xff]
    %v57 = vld [vmem:[%s1 + $0x108] sm:$0xff]
    %v58 = vld [vmem:[%s1 + $0x110] sm:$0xff]
    %v59 = vld [vmem:[%s1 + $0x118] sm:$0xff]
    %v60 = vld [vmem:[%s1 + $0x120] sm:$0xff]
    %v61 = vld [vmem:[%s1 + $0x128] sm:$0xf]
    %v62 = vld [vmem:[%s2] sm:$0x1]
    %v64 = vlaneseq
    %v65 = vshrl.u32 %v64, 7
    %v66 = vsub.s32 0, %v65
    %v67 = vrot.slane %v62, %v66
    %vm69 = vcmask 359424
    %v71 = vsel %vm69, %v23, 0
    %vm73 = vcmask 1043456
    %v75 = vsel %vm73, %v61, 0
    %77 = vmatprep.subr.mxu0 0.0
    %78 = vmatpush1.msra.mxu0 %v24
    %79 = vmatprep.subr.mxu0 0.0
    %80 = vmatpush1.msra.mxu0 %v25
    %81 = vmatprep.subr.mxu0 0.0
    %82 = vmatpush1.msra.mxu0 %v26
    %83 = vmatprep.subr.mxu0 0.0
    %84 = vmatpush1.msra.mxu0 %v27
    %85 = vmatprep.subr.mxu0 0.0
    %86 = vmatpush1.msra.mxu0 %v28
    %87 = vmatprep.subr.mxu0 0.0
    %88 = vmatpush1.msra.mxu0 %v29
    %89 = vmatprep.subr.mxu0 0.0
    %90 = vmatpush1.msra.mxu0 %v30
    %91 = vmatprep.subr.mxu0 0.0
    %92 = vmatpush1.msra.mxu0 %v31
    %93 = vmatprep.subr.mxu0 0.0
    %94 = vmatpush1.msra.mxu0 %v32
    %95 = vmatprep.subr.mxu0 0.0
    %96 = vmatpush1.msra.mxu0 %v33
    %97 = vmatprep.subr.mxu0 0.0
    %98 = vmatpush1.msra.mxu0 %v34
    %99 = vmatprep.subr.mxu0 0.0
    %100 = vmatpush1.msra.mxu0 %v35
    %101 = vmatprep.subr.mxu0 0.0
    %102 = vmatpush1.msra.mxu0 %v36
    %103 = vmatprep.subr.mxu0 0.0
    %104 = vmatpush1.msra.mxu0 %v37
    %105 = vmatprep.subr.mxu0 0.0
    %106 = vmatpush1.msra.mxu0 %v38
    %107 = vmatprep.subr.mxu0 0.0
    %108 = vmatpush1.msra.mxu0 %v39
    %109 = vmatprep.subr.mxu0 0.0
    %110 = vmatpush1.msra.mxu0 %v40
    %111 = vmatprep.subr.mxu0 0.0
    %112 = vmatpush1.msra.mxu0 %v41
    %113 = vmatprep.subr.mxu0 0.0
    %114 = vmatpush1.msra.mxu0 %v42
    %115 = vmatprep.subr.mxu0 0.0
    %116 = vmatpush1.msra.mxu0 %v43
    %117 = vmatprep.subr.mxu0 0.0
    %118 = vmatpush1.msra.mxu0 %v44
    %119 = vmatprep.subr.mxu0 0.0
    %120 = vmatpush1.msra.mxu0 %v45
    %121 = vmatprep.subr.mxu0 0.0
    %122 = vmatpush1.msra.mxu0 %v46
    %123 = vmatprep.subr.mxu0 0.0
    %124 = vmatpush1.msra.mxu0 %v47
    %125 = vmatprep.subr.mxu0 0.0
    %126 = vmatpush1.msra.mxu0 %v48
    %127 = vmatprep.subr.mxu0 0.0
    %128 = vmatpush1.msra.mxu0 %v49
    %129 = vmatprep.subr.mxu0 0.0
    %130 = vmatpush1.msra.mxu0 %v50
    %131 = vmatprep.subr.mxu0 0.0
    %132 = vmatpush1.msra.mxu0 %v51
    %133 = vmatprep.subr.mxu0 0.0
    %134 = vmatpush1.msra.mxu0 %v52
    %135 = vmatprep.subr.mxu0 0.0
    %136 = vmatpush1.msra.mxu0 %v53
    %137 = vmatprep.subr.mxu0 0.0
    %138 = vmatpush1.msra.mxu0 %v54
    %139 = vmatprep.subr.mxu0 0.0
    %140 = vmatpush1.msra.mxu0 %v55
    %141 = vmatprep.mubr.f32.mxu0 %v22
    %142 = vmatmul.mubr.f32.gmra.mrb[0].mxu0 %v21
    %v143 = vpop.f32.mrb[0].mxu0
    %v144 = vadd.f32 %v67, %v143
    %v145 = vpop.f32.mrb[0].mxu0
    %146 = vdwg.mxu0
    %147 = vmatprep.subr.mxu0 0.0
    %148 = vmatpush1.msra.mxu0 %v56
    %149 = vmatprep.subr.mxu0 0.0
    %150 = vmatpush1.msra.mxu0 %v57
    %151 = vmatprep.subr.mxu0 0.0
    %152 = vmatpush1.msra.mxu0 %v58
    %153 = vmatprep.subr.mxu0 0.0
    %154 = vmatpush1.msra.mxu0 %v59
    %155 = vmatprep.subr.mxu0 0.0
    %156 = vmatpush1.msra.mxu0 %v60
    %157 = vmatprep.subr.mxu0 0.0
    %158 = vmatpush1.msra.mxu0 %v75
    %159 = vmatprep.subr.mxu0 0.0
    %160 = vmatpush1.msra.mxu0 0.0
    %161 = vmatprep.subr.mxu0 0.0
    %162 = vmatpush1.msra.mxu0 0.0
    %163 = vmatprep.subr.mxu0 0.0
    %164 = vmatpush1.msra.mxu0 0.0
    %165 = vmatprep.subr.mxu0 0.0
    %166 = vmatpush1.msra.mxu0 0.0
    %167 = vmatprep.subr.mxu0 0.0
    %168 = vmatpush1.msra.mxu0 0.0
    %169 = vmatprep.subr.mxu0 0.0
    %170 = vmatpush1.msra.mxu0 0.0
    %171 = vmatprep.subr.mxu0 0.0
    %172 = vmatpush1.msra.mxu0 0.0
    %173 = vmatprep.subr.mxu0 0.0
    %174 = vmatpush1.msra.mxu0 0.0
    %175 = vmatprep.subr.mxu0 0.0
    %176 = vmatpush1.msra.mxu0 0.0
    %177 = vmatprep.subr.mxu0 0.0
    %178 = vmatpush1.msra.mxu0 0.0
    %179 = vmatprep.subr.mxu0 0.0
    %180 = vmatpush1.msra.mxu0 0.0
    %181 = vmatprep.subr.mxu0 0.0
    %182 = vmatpush1.msra.mxu0 0.0
    %183 = vmatprep.subr.mxu0 0.0
    %184 = vmatpush1.msra.mxu0 0.0
    %185 = vmatprep.subr.mxu0 0.0
    %186 = vmatpush1.msra.mxu0 0.0
    %187 = vmatprep.subr.mxu0 0.0
    %188 = vmatpush1.msra.mxu0 0.0
    %189 = vmatprep.subr.mxu0 0.0
    %190 = vmatpush1.msra.mxu0 0.0
    %191 = vmatprep.subr.mxu0 0.0
    %192 = vmatpush1.msra.mxu0 0.0
    %193 = vmatprep.subr.mxu0 0.0
    %194 = vmatpush1.msra.mxu0 0.0
    %195 = vmatprep.subr.mxu0 0.0
    %196 = vmatpush1.msra.mxu0 0.0
    %197 = vmatprep.subr.mxu0 0.0
    %198 = vmatpush1.msra.mxu0 0.0
    %199 = vmatprep.subr.mxu0 0.0
    %200 = vmatpush1.msra.mxu0 0.0
    %201 = vmatprep.subr.mxu0 0.0
    %202 = vmatpush1.msra.mxu0 0.0
    %203 = vmatprep.subr.mxu0 0.0
    %204 = vmatpush1.msra.mxu0 0.0
    %205 = vmatprep.subr.mxu0 0.0
    %206 = vmatpush1.msra.mxu0 0.0
    %207 = vmatprep.subr.mxu0 0.0
    %208 = vmatpush1.msra.mxu0 0.0
    %209 = vmatprep.subr.mxu0 0.0
    %210 = vmatpush1.msra.mxu0 0.0
    %211 = vmatprep.mubr.f32.mxu0 0.0
    %212 = vmatmul.mubr.f32.gmra.mrb[0].mxu0 %v71
    %v213 = vpop.f32.mrb[0].mxu0
    %v214 = vadd.f32 %v144, %v213
    %v215 = vpop.f32.mrb[0].mxu0
    %216 = vdwg.mxu0
    %vm217 = vcmp.gt.f32.partialorder %v214, 0.0
    %v218 = vsel %vm217, 1, 0
    %v219 = vcvt.s32.f32 %v218
    %v220 = vld [vmem:[%s3] sm:$0xff]
    %v221 = vld [vmem:[%s3 + $0x8] sm:$0xff]
    %v222 = vld [vmem:[%s3 + $0x10] sm:$0xff]
    %v223 = vld [vmem:[%s3 + $0x18] sm:$0xff]
    %v224 = vld [vmem:[%s3 + $0x20] sm:$0xff]
    %v225 = vld [vmem:[%s3 + $0x28] sm:$0xff]
    %v226 = vld [vmem:[%s3 + $0x30] sm:$0xff]
    %v227 = vld [vmem:[%s3 + $0x38] sm:$0xff]
    %v228 = vld [vmem:[%s3 + $0x40] sm:$0xff]
    %v229 = vld [vmem:[%s3 + $0x48] sm:$0xff]
    %v230 = vld [vmem:[%s3 + $0x50] sm:$0xff]
    %v231 = vld [vmem:[%s3 + $0x58] sm:$0xff]
    %v232 = vld [vmem:[%s3 + $0x60] sm:$0xff]
    %v233 = vld [vmem:[%s3 + $0x68] sm:$0xff]
    %v234 = vld [vmem:[%s3 + $0x70] sm:$0xff]
    %v235 = vld [vmem:[%s3 + $0x78] sm:$0xff]
    %v236 = vld [vmem:[%s3 + $0x80] sm:$0xff]
    %v237 = vld [vmem:[%s3 + $0x88] sm:$0xff]
    %v238 = vld [vmem:[%s3 + $0x90] sm:$0xff]
    %v239 = vld [vmem:[%s3 + $0x98] sm:$0xff]
    %v240 = vld [vmem:[%s3 + $0xa0] sm:$0xff]
    %v241 = vld [vmem:[%s3 + $0xa8] sm:$0xff]
    %v242 = vld [vmem:[%s3 + $0xb0] sm:$0xff]
    %v243 = vld [vmem:[%s3 + $0xb8] sm:$0xff]
    %v244 = vld [vmem:[%s3 + $0xc0] sm:$0xff]
    %v245 = vld [vmem:[%s3 + $0xc8] sm:$0xff]
    %v246 = vld [vmem:[%s3 + $0xd0] sm:$0xff]
    %v247 = vld [vmem:[%s3 + $0xd8] sm:$0xff]
    %v248 = vld [vmem:[%s3 + $0xe0] sm:$0xff]
    %v249 = vld [vmem:[%s3 + $0xe8] sm:$0xff]
    %v250 = vld [vmem:[%s3 + $0xf0] sm:$0xff]
    %v251 = vld [vmem:[%s3 + $0xf8] sm:$0xff]
    %v252 = vld [vmem:[%s3 + $0x100] sm:$0xff]
    %v253 = vld [vmem:[%s3 + $0x108] sm:$0xff]
    %v254 = vld [vmem:[%s3 + $0x110] sm:$0xff]
    %v255 = vld [vmem:[%s3 + $0x118] sm:$0xff]
    %v256 = vld [vmem:[%s3 + $0x120] sm:$0xff]
    %v257 = vld [vmem:[%s3 + $0x128] sm:$0xff]
    %v258 = vld [vmem:[%s3 + $0x130] sm:$0xff]
    %v259 = vld [vmem:[%s3 + $0x138] sm:$0xff]
    %v260 = vld [vmem:[%s3 + $0x140] sm:$0xff]
    %v261 = vld [vmem:[%s3 + $0x148] sm:$0xff]
    %v262 = vld [vmem:[%s3 + $0x150] sm:$0xff]
    %v263 = vld [vmem:[%s3 + $0x158] sm:$0xff]
    %v264 = vld [vmem:[%s3 + $0x160] sm:$0xff]
    %v265 = vld [vmem:[%s3 + $0x168] sm:$0xff]
    %v266 = vld [vmem:[%s3 + $0x170] sm:$0xff]
    %v267 = vld [vmem:[%s3 + $0x178] sm:$0xff]
    %v268 = vld [vmem:[%s4] sm:$0x7]
    %v270 = vlaneseq
    %v271 = vshrl.u32 %v270, 7
    %v272 = vsub.s32 0, %v271
    %v273 = vrot.slane %v268, %v272
    %v274 = vlaneseq
    %v275 = vshrl.u32 %v274, 7
    %v276 = vsub.s32 1, %v275
    %v277 = vrot.slane %v268, %v276
    %v278 = vlaneseq
    %v279 = vshrl.u32 %v278, 7
    %v280 = vsub.s32 2, %v279
    %v281 = vrot.slane %v268, %v280
    %285 = vmatprep.subr.mxu0 %v221
    %286 = vmatpush1.msra.mxu0 %v220
    %287 = vmatprep.subr.mxu0 %v224
    %288 = vmatpush1.msra.mxu0 %v223
    %289 = vmatprep.subr.mxu0 %v227
    %290 = vmatpush1.msra.mxu0 %v226
    %291 = vmatprep.subr.mxu0 %v230
    %292 = vmatpush1.msra.mxu0 %v229
    %293 = vmatprep.subr.mxu0 %v233
    %294 = vmatpush1.msra.mxu0 %v232
    %295 = vmatprep.subr.mxu0 %v236
    %296 = vmatpush1.msra.mxu0 %v235
    %297 = vmatprep.subr.mxu0 %v239
    %298 = vmatpush1.msra.mxu0 %v238
    %299 = vmatprep.subr.mxu0 %v242
    %300 = vmatpush1.msra.mxu0 %v241
    %301 = vmatprep.subr.mxu0 %v245
    %302 = vmatpush1.msra.mxu0 %v244
    %303 = vmatprep.subr.mxu0 %v248
    %304 = vmatpush1.msra.mxu0 %v247
    %305 = vmatprep.subr.mxu0 %v251
    %306 = vmatpush1.msra.mxu0 %v250
    %307 = vmatprep.subr.mxu0 %v254
    %308 = vmatpush1.msra.mxu0 %v253
    %309 = vmatprep.subr.mxu0 %v257
    %310 = vmatpush1.msra.mxu0 %v256
    %311 = vmatprep.subr.mxu0 %v260
    %312 = vmatpush1.msra.mxu0 %v259
    %313 = vmatprep.subr.mxu0 %v263
    %314 = vmatpush1.msra.mxu0 %v262
    %315 = vmatprep.subr.mxu0 %v266
    %316 = vmatpush1.msra.mxu0 %v265
    %317 = vmatprep.subr.mxu0 0.0
    %318 = vmatpush1.msra.mxu0 0.0
    %319 = vmatprep.subr.mxu0 0.0
    %320 = vmatpush1.msra.mxu0 0.0
    %321 = vmatprep.subr.mxu0 0.0
    %322 = vmatpush1.msra.mxu0 0.0
    %323 = vmatprep.subr.mxu0 0.0
    %324 = vmatpush1.msra.mxu0 0.0
    %325 = vmatprep.subr.mxu0 0.0
    %326 = vmatpush1.msra.mxu0 0.0
    %327 = vmatprep.subr.mxu0 0.0
    %328 = vmatpush1.msra.mxu0 0.0
    %329 = vmatprep.subr.mxu0 0.0
    %330 = vmatpush1.msra.mxu0 0.0
    %331 = vmatprep.subr.mxu0 0.0
    %332 = vmatpush1.msra.mxu0 0.0
    %333 = vmatprep.subr.mxu0 0.0
    %334 = vmatpush1.msra.mxu0 0.0
    %335 = vmatprep.subr.mxu0 0.0
    %336 = vmatpush1.msra.mxu0 0.0
    %337 = vmatprep.subr.mxu0 0.0
    %338 = vmatpush1.msra.mxu0 0.0
    %339 = vmatprep.subr.mxu0 0.0
    %340 = vmatpush1.msra.mxu0 0.0
    %341 = vmatprep.subr.mxu0 0.0
    %342 = vmatpush1.msra.mxu0 0.0
    %343 = vmatprep.subr.mxu0 0.0
    %344 = vmatpush1.msra.mxu0 0.0
    %345 = vmatprep.subr.mxu0 0.0
    %346 = vmatpush1.msra.mxu0 0.0
    %347 = vmatprep.subr.mxu0 0.0
    %348 = vmatpush1.msra.mxu0 0.0
    %349 = vmatprep.mubr.f32.mxu0 0.0
    %350 = vmatmul.mubr.f32.gmra.mrb[0].mxu0 %v219
    %v351 = vpop.f32.mrb[0].mxu0
    %v352 = vadd.f32 %v273, %v351
    %v353 = vpop.f32.mrb[0].mxu0
    %v354 = vadd.f32 %v277, %v353
    %355 = vdwg.mxu0
    %356 = vmatprep.subr.mxu0 0.0
    %357 = vmatpush1.msra.mxu0 %v222
    %358 = vmatprep.subr.mxu0 0.0
    %359 = vmatpush1.msra.mxu0 %v225
    %360 = vmatprep.subr.mxu0 0.0
    %361 = vmatpush1.msra.mxu0 %v228
    %362 = vmatprep.subr.mxu0 0.0
    %363 = vmatpush1.msra.mxu0 %v231
    %364 = vmatprep.subr.mxu0 0.0
    %365 = vmatpush1.msra.mxu0 %v234
    %366 = vmatprep.subr.mxu0 0.0
    %367 = vmatpush1.msra.mxu0 %v237
    %368 = vmatprep.subr.mxu0 0.0
    %369 = vmatpush1.msra.mxu0 %v240
    %370 = vmatprep.subr.mxu0 0.0
    %371 = vmatpush1.msra.mxu0 %v243
    %372 = vmatprep.subr.mxu0 0.0
    %373 = vmatpush1.msra.mxu0 %v246
    %374 = vmatprep.subr.mxu0 0.0
    %375 = vmatpush1.msra.mxu0 %v249
    %376 = vmatprep.subr.mxu0 0.0
    %377 = vmatpush1.msra.mxu0 %v252
    %378 = vmatprep.subr.mxu0 0.0
    %379 = vmatpush1.msra.mxu0 %v255
    %380 = vmatprep.subr.mxu0 0.0
    %381 = vmatpush1.msra.mxu0 %v258
    %382 = vmatprep.subr.mxu0 0.0
    %383 = vmatpush1.msra.mxu0 %v261
    %384 = vmatprep.subr.mxu0 0.0
    %385 = vmatpush1.msra.mxu0 %v264
    %386 = vmatprep.subr.mxu0 0.0
    %387 = vmatpush1.msra.mxu0 %v267
    %388 = vmatprep.subr.mxu0 0.0
    %389 = vmatpush1.msra.mxu0 0.0
    %390 = vmatprep.subr.mxu0 0.0
    %391 = vmatpush1.msra.mxu0 0.0
    %392 = vmatprep.subr.mxu0 0.0
    %393 = vmatpush1.msra.mxu0 0.0
    %394 = vmatprep.subr.mxu0 0.0
    %395 = vmatpush1.msra.mxu0 0.0
    %396 = vmatprep.subr.mxu0 0.0
    %397 = vmatpush1.msra.mxu0 0.0
    %398 = vmatprep.subr.mxu0 0.0
    %399 = vmatpush1.msra.mxu0 0.0
    %400 = vmatprep.subr.mxu0 0.0
    %401 = vmatpush1.msra.mxu0 0.0
    %402 = vmatprep.subr.mxu0 0.0
    %403 = vmatpush1.msra.mxu0 0.0
    %404 = vmatprep.subr.mxu0 0.0
    %405 = vmatpush1.msra.mxu0 0.0
    %406 = vmatprep.subr.mxu0 0.0
    %407 = vmatpush1.msra.mxu0 0.0
    %408 = vmatprep.subr.mxu0 0.0
    %409 = vmatpush1.msra.mxu0 0.0
    %410 = vmatprep.subr.mxu0 0.0
    %411 = vmatpush1.msra.mxu0 0.0
    %412 = vmatprep.subr.mxu0 0.0
    %413 = vmatpush1.msra.mxu0 0.0
    %414 = vmatprep.subr.mxu0 0.0
    %415 = vmatpush1.msra.mxu0 0.0
    %416 = vmatprep.subr.mxu0 0.0
    %417 = vmatpush1.msra.mxu0 0.0
    %418 = vmatprep.subr.mxu0 0.0
    %419 = vmatpush1.msra.mxu0 0.0
    %420 = vmatprep.mubr.f32.mxu0 0.0
    %421 = vmatmul.mubr.f32.gmra.mrb[0].mxu0 %v219
    %v422 = vpop.f32.mrb[0].mxu0
    %v423 = vadd.f32 %v281, %v422
    %v424 = vpop.f32.mrb[0].mxu0
    %425 = vdwg.mxu0
    %v426 = vtanh.pop %v352
    %v427 = vtanh.pop %v354
    %v428 = vtanh.pop %v423
    %429 = vst [vmem:[#allocation2] sm:$0xff] %v426
    %430 = vst [vmem:[#allocation2 + $0x8] sm:$0xff] %v427
    %431 = vst.msk [vmem:[#allocation2 + $0x10] sm:$0xff] %vm69, %v428
    // Predicated region
    $region22: #{tpu_custom_call.1} parent=1 // pred_check
      _
    $region23: #{tpu_custom_call.1} parent=1 // pred_check_branch
      %433 = sbr.rel (0) target = $region25
    $region24: #{tpu_custom_call.1} parent=1 // pred_region
      %s435 = ssub.s32 384, 384
      %436 = vsyncadd [#allocation3], %s435
      %s438 = sshll.u32 [#allocation2], 4
      %s439 = int_to_ptr.vmem [resolvable:$true] %s438
      %441 = dma.vmem_to_hbm [thread:$0]  %s439, 384, %s5, [#allocation3]
    $region25: #{tpu_custom_call.1} parent=1 // pred_fallthru
      _
    // Predicated region
    $region26: #{tpu_custom_call.1} parent=1 // pred_check
      _
    $region27: #{tpu_custom_call.1} parent=1 // pred_check_branch
      %443 = sbr.rel (0) target = $region29
    $region28: #{tpu_custom_call.1} parent=1 // pred_region
      %444 = dma.done [#allocation3], 384
    $region29: #{tpu_custom_call.1} parent=1 // pred_fallthru
      _
    %445 = vsyncpa [#allocation3], 1

</llo_original>
